<compile_context>
chip_gen: v7x
topology: tpu7x:2x2x1
jax: 0.10.0
libtpu: 0.0.40
codegen_flags: <defaults>
</compile_context>

<pallas_src>
import functools

import jax
import jax.numpy as jnp
from jax.experimental import pallas as pl
from jax.experimental.pallas import tpu as pltpu

_LANE = 128
_SUBLANE = 8
_NEG_BIG = -1.0e30  # exp(-1e30 - m) underflows to exactly 0 in f32; max unaffected


def _round_up(x, m):
    return ((x + m - 1) // m) * m


@functools.lru_cache(maxsize=None)
def _generation_tiling():
    """(max_batch_tile, vmem_limit_cap_bytes) sized to the local TPU generation."""
    try:
        info = pltpu.get_tpu_info()
        cap = int(getattr(info, "vmem_capacity_bytes", 64 << 20))
    except Exception:  # query unavailable -> assume the smallest (v7x-style) VMEM
        cap = 64 << 20
    if cap >= (100 << 20):      # v5e / v6e: 128 MiB VMEM -> big tiles amortize step overhead
        return 2048, 100 << 20
    return 512, 48 << 20        # v7x: 64 MiB VMEM per TensorCore -> stay conservative


def _categorical_kernel(x_ref, w_ref, b_ref, out_ref, *, n_out):
    # x_ref:   (TB, K)     bf16 batch tile
    # w_ref:   (K, N_pad)  bf16, resident in VMEM across all batch tiles
    # b_ref:   (1, N_pad)  f32, padded lanes hold -1e30
    # out_ref: (TB, N)     f32 normalized logits (only the real lanes are stored)
    logits = jnp.dot(x_ref[...], w_ref[...], preferred_element_type=jnp.float32)
    logits = logits + b_ref[...]  # padded lanes -> -1e30, real lanes -> true bias

    # Categorical(logits=...) normalization: logits - logsumexp(logits, -1).
    # Row-wise math only, so garbage rows of a ragged last batch block cannot
    # contaminate valid rows; padded lanes contribute exp(...) == 0 to the sum.
    m = jnp.max(logits, axis=-1, keepdims=True)
    z = jnp.exp(logits - m)
    lse = m + jnp.log(jnp.sum(z, axis=-1, keepdims=True))
    out_ref[...] = (logits - lse)[:, :n_out].astype(out_ref.dtype)


def prepare_categorical_params(weight, bias, compute_dtype=jnp.bfloat16):
    """One-time parameter prep (hoisted out of the per-call forward path).

    weight: (num_outputs, num_inputs)  -- torch nn.Linear layout
    bias:   (num_outputs,)
    Returns (w_prepped, b_prepped, num_outputs):
      w_prepped: (num_inputs, N_pad) compute_dtype, zero in padded output lanes
      b_prepped: (1, N_pad) float32, -1e30 in padded lanes (vanish from logsumexp)
    """
    num_outputs, num_inputs = weight.shape
    n_pad = _round_up(max(num_outputs, _LANE), _LANE)
    w_prepped = jnp.zeros((num_inputs, n_pad), dtype=compute_dtype)
    w_prepped = w_prepped.at[:, :num_outputs].set(weight.T.astype(compute_dtype))
    b_prepped = jnp.full((1, n_pad), _NEG_BIG, dtype=jnp.float32)
    b_prepped = b_prepped.at[:, :num_outputs].set(bias.astype(jnp.float32))
    return w_prepped, b_prepped, num_outputs


@functools.partial(jax.jit, static_argnames=("num_outputs", "block_b"))
def categorical_forward(x, w_prepped, b_prepped, *, num_outputs, block_b=None):
    """Normalized logits of FixedCategorical(logits = x @ W.T + b).

    x: (B, num_inputs) activations (any float dtype; cast to the compute dtype).
    Returns (B, num_outputs) float32 normalized logits.
    """
    B, K = x.shape
    K_w, N_pad = w_prepped.shape
    assert K == K_w, "x feature dim must match prepared weight"
    N = int(num_outputs)

    max_tb, vmem_cap = _generation_tiling()
    if block_b is None:
        block_b = max_tb
    block_b = _round_up(block_b, _SUBLANE)

    compute_dtype = w_prepped.dtype
    x_in = x.astype(compute_dtype)
    x_bytes = x_in.dtype.itemsize
    w_bytes = w_prepped.dtype.itemsize

    # Batch tile: multiple of 8 sublanes, targeting >= 4 grid steps when B allows so
    # the DMA pipeline has depth and v7x can shard the batch across both TCs.
    TB = max(_SUBLANE, _round_up(-(-B // 4), _SUBLANE))
    TB = min(TB, block_b, _round_up(B, _SUBLANE))

    def _vmem_need(tb):
        return (2 * tb * K * x_bytes        # double-buffered x tile
                + 2 * tb * N * 4            # double-buffered output tile
                + 2 * K * N_pad * w_bytes   # resident W (worst case 2 buffers)
                + 2 * N_pad * 4)            # resident bias

    while _vmem_need(TB) > vmem_cap and TB > _SUBLANE:
        TB = _round_up(max(TB // 2, _SUBLANE), _SUBLANE)
    # TODO(synk): a resident-W block larger than VMEM (huge num_inputs*num_outputs on
    # v7x) would need a K grid axis + f32 accumulator scratch; PPO heads never hit it.

    grid = (pl.cdiv(B, TB),)
    vmem_limit = int(min(max(2 * _vmem_need(TB), 4 << 20), vmem_cap))

    cost = pl.CostEstimate(
        flops=2 * B * K * N,
        transcendentals=B * (N + 1),  # exp per logit + log per row
        bytes_accessed=(B * K * x_bytes + K * N_pad * w_bytes + N_pad * 4
                        + B * N * 4),
    )

    kernel = functools.partial(_categorical_kernel, n_out=N)
    return pl.pallas_call(
        kernel,
        out_shape=jax.ShapeDtypeStruct((B, N), jnp.float32),
        grid=grid,
        in_specs=[
            pl.BlockSpec((TB, K), lambda i: (i, 0)),      # batch-tiled x, ragged last block OK
            pl.BlockSpec((K, N_pad), lambda i: (0, 0)),   # W resident in VMEM
            pl.BlockSpec((1, N_pad), lambda i: (0, 0)),   # bias resident in VMEM
        ],
        out_specs=pl.BlockSpec((TB, N), lambda i: (i, 0)),  # unpadded (B, N) output
        compiler_params=pltpu.CompilerParams(
            dimension_semantics=("parallel",),   # batch rows are independent
            vmem_limit_bytes=vmem_limit,
        ),
        cost_estimate=cost,
    )(x_in, w_prepped, b_prepped)


def orthogonal_init(key, shape, gain):
    """Deterministic orthogonal init matching nn.init.orthogonal_ semantics."""
    rows, cols = shape
    n = max(rows, cols)
    a = jax.random.normal(key, (n, n), dtype=jnp.float32)
    q, r = jnp.linalg.qr(a)
    q = q * jnp.sign(jnp.diag(r))  # sign correction, as in PyTorch
    return gain * q[:rows, :cols]


if __name__ == "__main__":
    key = jax.random.PRNGKey(0)
    k_x, k_w = jax.random.split(key)

    batch = 4
    num_inputs = 32   # hidden size
    num_outputs = 8   # action space size

    # Parameters matching the module __init__: orthogonal_ weight (gain=0.01), bias 0.
    W = orthogonal_init(k_w, (num_outputs, num_inputs), gain=0.01)  # torch layout
    b = jnp.zeros((num_outputs,), dtype=jnp.float32)
    x = jax.random.normal(k_x, (batch, num_inputs), dtype=jnp.float32)

    # One-time layout/dtype prep (not on the per-call path).
    w_prepped, b_prepped, n_out = prepare_categorical_params(W, b)

    out = categorical_forward(x, w_prepped, b_prepped, num_outputs=n_out)
    out = jax.block_until_ready(out)
    assert out.shape == (batch, num_outputs)

    # Reference with the kernel's precision (bf16 operands, f32 accumulation).
    ref_logits = jnp.dot(x.astype(jnp.bfloat16), W.T.astype(jnp.bfloat16),
                         preferred_element_type=jnp.float32) + b
    ref = ref_logits - jax.scipy.special.logsumexp(ref_logits, axis=-1, keepdims=True)
    assert jnp.allclose(out, ref, atol=1e-3, rtol=1e-3), "mismatch vs bf16 reference"

    # Sanity vs the full-f32 PyTorch-equivalent math (bf16 operand rounding only).
    ref32_logits = x @ W.T + b
    ref32 = ref32_logits - jax.scipy.special.logsumexp(ref32_logits, axis=-1, keepdims=True)
    assert jnp.allclose(out, ref32, atol=1e-2, rtol=1e-2), "mismatch vs f32 reference"

    # TODO(synk): FixedCategorical's sample/log_prob/entropy consume these normalized
    # logits and are not part of this forward kernel.

    print("KERNEL_OK")
</pallas_src>

<mosaic_0001>
module attributes {stable_mosaic.version = 11 : i64} {
  func.func @_categorical_kernel(%arg0: i32, %arg1: memref<8x32xbf16, #tpu.memory_space<vmem>>, %arg2: memref<32x128xbf16, #tpu.memory_space<vmem>>, %arg3: memref<1x128xf32, #tpu.memory_space<vmem>>, %arg4: memref<8x8xf32, #tpu.memory_space<vmem>>) attributes {dimension_semantics = [#tpu.dimension_semantics<parallel>], iteration_bounds = array<i64: 1>, scalar_prefetch = 0 : i64, scratch_operands = 0 : i64, tpu.core_type = #tpu.core_type<tc>, window_params = [{transform_indices = @transform_0, window_bounds = array<i64: 8, 32>}, {pipeline_mode = #tpu.pipeline_mode<synchronous>, transform_indices = @transform_1, window_bounds = array<i64: 32, 128>}, {pipeline_mode = #tpu.pipeline_mode<synchronous>, transform_indices = @transform_2, window_bounds = array<i64: 1, 128>}, {transform_indices = @transform_3, window_bounds = array<i64: 8, 8>}]} {
    %c0 = arith.constant 0 : index
    %c0_0 = arith.constant 0 : index
    %0 = vector.load %arg1[%c0, %c0_0] : memref<8x32xbf16, #tpu.memory_space<vmem>>, vector<8x32xbf16>
    %c0_1 = arith.constant 0 : index
    %c0_2 = arith.constant 0 : index
    %1 = vector.load %arg2[%c0_1, %c0_2] : memref<32x128xbf16, #tpu.memory_space<vmem>>, vector<32x128xbf16>
    %cst = arith.constant dense<0.000000e+00> : vector<8x128xf32>
    %2 = tpu.matmul %0, %1, %cst {dimension_numbers = #tpu.dot_dimension_numbers<[1], [0], [0], [1], [0, 0, 1, 1], [], []>} : vector<8x32xbf16>, vector<32x128xbf16>, vector<8x128xf32> -> vector<8x128xf32>
    %c0_3 = arith.constant 0 : index
    %c0_4 = arith.constant 0 : index
    %3 = vector.load %arg3[%c0_3, %c0_4] : memref<1x128xf32, #tpu.memory_space<vmem>>, vector<1x128xf32>
    %4 = vector.broadcast %3 : vector<1x128xf32> to vector<8x128xf32>
    %5 = arith.addf %2, %4 : vector<8x128xf32>
    %cst_5 = arith.constant dense<0xFF800000> : vector<8xf32>
    %6 = vector.multi_reduction <maximumf>, %5, %cst_5 [1] : vector<8x128xf32> to vector<8xf32>
    %7 = vector.shape_cast %6 : vector<8xf32> to vector<8x1xf32>
    %8 = vector.broadcast %7 : vector<8x1xf32> to vector<8x128xf32>
    %9 = arith.subf %5, %8 : vector<8x128xf32>
    %10 = math.exp %9 : vector<8x128xf32>
    %cst_6 = arith.constant dense<0.000000e+00> : vector<8xf32>
    %11 = vector.multi_reduction <add>, %10, %cst_6 [1] : vector<8x128xf32> to vector<8xf32>
    %12 = vector.shape_cast %11 : vector<8xf32> to vector<8x1xf32>
    %13 = math.log %12 : vector<8x1xf32>
    %14 = arith.addf %7, %13 : vector<8x1xf32>
    %15 = vector.broadcast %14 : vector<8x1xf32> to vector<8x128xf32>
    %16 = arith.subf %5, %15 : vector<8x128xf32>
    %17 = vector.extract_strided_slice %16 {offsets = [0, 0], sizes = [8, 8], strides = [1, 1]} : vector<8x128xf32> to vector<8x8xf32>
    %c0_7 = arith.constant 0 : index
    %c0_8 = arith.constant 0 : index
    %18 = vector.load %arg4[%c0_7, %c0_8] : memref<8x8xf32, #tpu.memory_space<vmem>>, vector<8x8xf32>
    tpu.vector_store %arg4[%c0_7, %c0_8], %17 {strides = array<i32>} : memref<8x8xf32, #tpu.memory_space<vmem>>, vector<8x8xf32>,
    return
  }
  func.func @transform_0(%arg0: i32) -> (i32, i32) {
    %c0_i32 = arith.constant 0 : i32
    %c0_i32_0 = arith.constant 0 : i32
    return %arg0, %c0_i32 : i32, i32
  }
  func.func @transform_1(%arg0: i32) -> (i32, i32) {
    %c0_i32 = arith.constant 0 : i32
    %c0_i32_0 = arith.constant 0 : i32
    %c0_i32_1 = arith.constant 0 : i32
    return %c0_i32, %c0_i32_0 : i32, i32
  }
  func.func @transform_2(%arg0: i32) -> (i32, i32) {
    %c0_i32 = arith.constant 0 : i32
    %c0_i32_0 = arith.constant 0 : i32
    %c0_i32_1 = arith.constant 0 : i32
    return %c0_i32, %c0_i32_0 : i32, i32
  }
  func.func @transform_3(%arg0: i32) -> (i32, i32) {
    %c0_i32 = arith.constant 0 : i32
    %c0_i32_0 = arith.constant 0 : i32
    return %arg0, %c0_i32 : i32, i32
  }
}

</mosaic_0001>

<llo_original>
// kernel: categorical_forward.1
$region0: #{categorical_forward.1}
  #allocation0 [shape = 'u32[]', space=smem, size = 0x4, offset = 0x4, fixed_abs, tag = 'smem constant byte address 0x4 - core index']
  #allocation1 [shape = 'u32[144,128]{1,0:T(1,128)}', space=vmem, size = 0x12000, scoped, tag = 'internal scratch']
  %s0 = inlined_call_operand.vmem [shape: bf16[4,32], index: 0, kind: input, shape index: {}]
  %s1 = inlined_call_operand.hbm [shape: bf16[32,128], index: 1, kind: input, shape index: {}]
  %s2 = inlined_call_operand.vmem [shape: f32[1,128], index: 2, kind: input, shape index: {}]
  %s3 = inlined_call_operand.hbm [shape: f32[4,8], index: 3, kind: output, shape index: {}]
  %s4 = sld [smem:[#allocation0]]
  $region26: #{categorical_forward.1} parent=0
    _
  %s6 = ssub.s32 1, %s4
  %s7 = scalar_select 0, %s6, %s4
  $region1: #{categorical_forward.1} parent=0
    #allocation2 [shape = 'u8[8192]{0}', space=vmem, size = 0x2000, scoped, tag = 'input window, operand 1, single buffered']
    #allocation3 [shape = 's32[1]{0}', space=sflag, size = 0x4, scoped, tag = 'scoped memory for categorical_forward.1']
    #allocation4 [shape = 's32[1]{0}', space=sflag, size = 0x4, scoped, tag = 'scoped memory for categorical_forward.1']
    #allocation5 [shape = 'u8[4096]{0}', space=vmem, size = 0x1000, scoped, tag = 'output window, operand 0, single buffered']
    %8 = vsyncpa [#allocation3], 0
    %9 = vsyncpa [#allocation4], 0
    // Predicated region
    $region2: #{categorical_forward.1} parent=1 // pred_check
      _
    $region3: #{categorical_forward.1} parent=1 // pred_check_branch
      %11 = sbr.rel (0) target = $region5
    $region4: #{categorical_forward.1} parent=1 // pred_region
      _
    $region5: #{categorical_forward.1} parent=1 // pred_fallthru
      _
    // Predicated region
    $region6: #{categorical_forward.1} parent=1 // pred_check
      _
    $region7: #{categorical_forward.1} parent=1 // pred_check_branch
      %13 = sbr.rel (0) target = $region9
    $region8: #{categorical_forward.1} parent=1 // pred_region
      %s15 = ssub.s32 256, 256
      %16 = vsyncadd [#allocation3], %s15
      %s17 = sshll.u32 [#allocation2], 4
      %s18 = int_to_ptr.vmem [resolvable:$true] %s17
      %23 = dma.hbm_to_vmem [thread:$0]  %s1, 256, %s18, [#allocation3], 64, 64, 4
    $region9: #{categorical_forward.1} parent=1 // pred_fallthru
      _
    // Predicated region
    $region10: #{categorical_forward.1} parent=1 // pred_check
      _
    $region11: #{categorical_forward.1} parent=1 // pred_check_branch
      %25 = sbr.rel (0) target = $region13
    $region12: #{categorical_forward.1} parent=1 // pred_region
      _
    $region13: #{categorical_forward.1} parent=1 // pred_fallthru
      _
    // Predicated region
    $region14: #{categorical_forward.1} parent=1 // pred_check
      _
    $region15: #{categorical_forward.1} parent=1 // pred_check_branch
      %27 = sbr.rel (0) target = $region17
    $region16: #{categorical_forward.1} parent=1 // pred_region
      %28 = dma.done [#allocation3], 256
    $region17: #{categorical_forward.1} parent=1 // pred_fallthru
      _
    %v30 = vld [vmem:[%s0] sm:$0x3]
    %v31 = vld [vmem:[%s0 + $0x2] sm:$0x3]
    %v32 = vld [vmem:[#allocation2] sm:$0xf]
    %v33 = vld [vmem:[#allocation2 + $0x4] sm:$0xf]
    %v34 = vld [vmem:[#allocation2 + $0x8] sm:$0xf]
    %v35 = vld [vmem:[#allocation2 + $0xc] sm:$0xf]
    %v36 = vld [vmem:[%s2] sm:$0x1]
    %v38 = vlaneseq
    %v39 = vshrl.u32 %v38, 7
    %v40 = vsub.s32 0, %v39
    %v41 = vrot.slane %v36, %v40
    %v45 = vcombine.low %v30, %v31
    %v47 = vunpack.c.l.s4 1983009808
    %v48 = vunpack.c.0.s8 %v47
    %v49 = vlaneseq
    %v50 = vshrl.u32 %v49, 7
    %v51 = vsub.s32 %v48, %v50
    %v52 = vrot.slane %v45, %v51
    %v57 = vunpack.c.l.b16 %v32
    %v58 = vunpack.c.l.b16 %v33
    %v59 = vunpack.c.l.b16 %v34
    %v60 = vunpack.c.l.b16 %v35
    %v61 = vpack.c.b16 %v58, %v57
    %v62 = vpack.c.b16 %v60, %v59
    %vm65 = vcmask 261120
    %v67 = vsel %vm65, %v52, 0
    %69 = vmatprep.subr.bf16.mxu0 0
    %70 = vmatpush1.bf16.msra.mxu0 %v61
    %71 = vmatprep.subr.bf16.mxu0 0
    %72 = vmatpush1.bf16.msra.mxu0 %v62
    %73 = vmatprep.subr.bf16.mxu0 0
    %74 = vmatpush1.bf16.msra.mxu0 0
    %75 = vmatprep.subr.bf16.mxu0 0
    %76 = vmatpush1.bf16.msra.mxu0 0
    %77 = vmatprep.subr.bf16.mxu0 0
    %78 = vmatpush1.bf16.msra.mxu0 0
    %79 = vmatprep.subr.bf16.mxu0 0
    %80 = vmatpush1.bf16.msra.mxu0 0
    %81 = vmatprep.subr.bf16.mxu0 0
    %82 = vmatpush1.bf16.msra.mxu0 0
    %83 = vmatprep.subr.bf16.mxu0 0
    %84 = vmatpush1.bf16.msra.mxu0 0
    %85 = vmatprep.subr.bf16.mxu0 0
    %86 = vmatpush1.bf16.msra.mxu0 0
    %87 = vmatprep.subr.bf16.mxu0 0
    %88 = vmatpush1.bf16.msra.mxu0 0
    %89 = vmatprep.subr.bf16.mxu0 0
    %90 = vmatpush1.bf16.msra.mxu0 0
    %91 = vmatprep.subr.bf16.mxu0 0
    %92 = vmatpush1.bf16.msra.mxu0 0
    %93 = vmatprep.subr.bf16.mxu0 0
    %94 = vmatpush1.bf16.msra.mxu0 0
    %95 = vmatprep.subr.bf16.mxu0 0
    %96 = vmatpush1.bf16.msra.mxu0 0
    %97 = vmatprep.subr.bf16.mxu0 0
    %98 = vmatpush1.bf16.msra.mxu0 0
    %99 = vmatprep.subr.bf16.mxu0 0
    %100 = vmatpush1.bf16.msra.mxu0 0
    %101 = vmatprep.mubr.bf16.mxu0 0
    %102 = vmatmul.mubr.bf16.gmra.mrb[0].mxu0 %v67
    %v103 = vpop.f32.mrb[0].mxu0
    %v104 = vadd.f32 %v41, %v103
    %v105 = vpop.f32.mrb[0].mxu0
    %v106 = vpop.f32.mrb[0].mxu0
    %v107 = vpop.f32.mrb[0].mxu0
    %108 = vdwg.mxu0
    %109 = vmax.xlane.f32.xlu0 %v104
    %v110 = vpop.xlane.xlu0 %109
    %v111 = vsub.f32 %v104, %v110
    %v112 = vmul.f32 %v111, 1.442695
    %v113 = vpow.pop %v112
    %114 = vadd.xlane.f32.xlu0 %v113
    %v115 = vpop.xlane.xlu0 %114
    %v116 = vlog2.pop %v115
    %v117 = vmul.f32 %v116, 0.6931472
    %v118 = vadd.f32 %v110, %v117
    %v119 = vsub.f32 %v104, %v118
    %vm120 = vcmask 64512
    %121 = vst.msk [vmem:[#allocation5] sm:$0xff] %vm120, %v119
    // Predicated region
    $region18: #{categorical_forward.1} parent=1 // pred_check
      _
    $region19: #{categorical_forward.1} parent=1 // pred_check_branch
      %123 = sbr.rel (0) target = $region21
    $region20: #{categorical_forward.1} parent=1 // pred_region
      %s125 = ssub.s32 128, 64
      %126 = vsyncadd [#allocation4], %s125
      %s127 = sshll.u32 [#allocation5], 4
      %s128 = int_to_ptr.vmem [resolvable:$true] %s127
      %133 = dma.vmem_to_hbm [thread:$0]  %s128, 64, %s3, [#allocation4], 64, 64, 4
    $region21: #{categorical_forward.1} parent=1 // pred_fallthru
      _
    // Predicated region
    $region22: #{categorical_forward.1} parent=1 // pred_check
      _
    $region23: #{categorical_forward.1} parent=1 // pred_check_branch
      %135 = sbr.rel (0) target = $region25
    $region24: #{categorical_forward.1} parent=1 // pred_region
      %136 = dma.done [#allocation4], 128
    $region25: #{categorical_forward.1} parent=1 // pred_fallthru
      _
    %137 = vsyncpa [#allocation3], 1
    %138 = vsyncpa [#allocation4], 1

</llo_original>
